<compile_context>
chip_gen: v6e
topology: v6e:2x2x1
jax: 0.10.0
libtpu: 0.0.40
codegen_flags: <defaults>
</compile_context>

<pallas_src>
import math

import jax
import jax.numpy as jnp
from jax.experimental import pallas as pl
from jax.experimental.pallas import tpu as pltpu


_MIB = 1024 * 1024
# Max interior row count for the lane-dense "assemble rows in registers" path when
# W needs padding (bounds jnp.concatenate operand count / codegen size).
_MAX_ASSEMBLED_ROWS = 64


def _same_pad_amounts(H, W, kernel_size, stride):
    ks = list(kernel_size) if isinstance(kernel_size, (list, tuple)) else [kernel_size, kernel_size]
    st = list(stride) if isinstance(stride, (list, tuple)) else [stride, stride]
    out_h = math.ceil(float(H) / float(st[0]))
    out_w = math.ceil(float(W) / float(st[1]))
    pad_along_h = (out_h - 1) * st[0] + ks[0] - H
    pad_along_w = (out_w - 1) * st[1] + ks[1] - W
    pad_top = math.floor(pad_along_h / 2)
    pad_left = math.floor(pad_along_w / 2)
    pad_bottom = pad_along_h - pad_top
    pad_right = pad_along_w - pad_left
    return pad_top, pad_bottom, pad_left, pad_right


def _vmem_policy():
    """Generation-aware (per-step in+out budget, scoped vmem_limit_bytes)."""
    cap = 0
    try:
        cap = int(getattr(pltpu.get_tpu_info(), "vmem_capacity_bytes", 0) or 0)
    except Exception:
        cap = 0
    if cap >= 128 * _MIB:               # v5e / v6e: 128 MiB physical VMEM
        return 12 * _MIB, 64 * _MIB
    return 6 * _MIB, 40 * _MIB          # v7x (64 MiB per TC) or unknown: conservative


def _sublane_pack(itemsize):
    if itemsize >= 4:
        return 8
    return 8 * (4 // itemsize)          # 16 for bf16/f16, 32 for int8/fp8


def _pick_flat_rows(NC, bytes_per_row, budget, pack):
    """Rows per block for the (NC, HW) layout: multiple of the sublane pack,
    within the per-step budget, and capped so large problems keep >= ~8 steps."""
    if NC <= pack:
        return NC                       # full leading dim: tiling rule satisfied
    by_budget = max(pack, (budget // max(bytes_per_row, 1)) // pack * pack)
    rows_per_step = -(-NC // 8)                       # ceil(NC / 8)  -> >= 8 steps
    rows_per_step = -(-rows_per_step // pack) * pack  # round up to the pack
    cb = min(by_budget, rows_per_step, (NC // pack) * pack)
    return max(pack, cb)


def _build_flat_kernel(cb, dtype, W, W_out, HW_out, src_h0, src_w0,
                       copy_h, copy_w, dst_h0, dst_w0, w_contig):
    """Lane-dense kernel: blocks are (cb, H*W) -> (cb, H_out*W_out)."""
    right_w = W_out - dst_w0 - copy_w
    top_len = dst_h0 * W_out
    mid_len = copy_h * W_out
    bot_len = HW_out - top_len - mid_len

    def kernel(x_ref, o_ref):
        if w_contig:
            # No W padding: interior is one contiguous flat run.
            s0 = src_h0 * W
            mid = x_ref[:, s0:s0 + mid_len]
        else:
            # Assemble [left zeros | row | right zeros] per interior row in
            # registers (XLU/VALU slack), then issue ONE dense store below.
            zl = jnp.zeros((cb, dst_w0), dtype) if dst_w0 > 0 else None
            zr = jnp.zeros((cb, right_w), dtype) if right_w > 0 else None
            parts = []
            for r in range(copy_h):
                if zl is not None:
                    parts.append(zl)
                s0 = (src_h0 + r) * W + src_w0
                parts.append(x_ref[:, s0:s0 + copy_w])
                if zr is not None:
                    parts.append(zr)
            mid = parts[0] if len(parts) == 1 else jnp.concatenate(parts, axis=1)
        o_ref[:, top_len:top_len + mid_len] = mid
        if top_len > 0:
            o_ref[:, :top_len] = jnp.zeros((cb, top_len), dtype)
        if bot_len > 0:
            o_ref[:, top_len + mid_len:] = jnp.zeros((cb, bot_len), dtype)

    return kernel


def _build_nchw_kernel(cb, dtype, H, W, H_out, W_out, src_h0, src_w0,
                       copy_h, copy_w, dst_h0, dst_w0):
    """Fallback (tall interiors with W padding): (cb, H, W) -> (cb, H_out, W_out);
    interior written once, only the border strips zero-filled."""
    bot_h = H_out - dst_h0 - copy_h
    right_w = W_out - dst_w0 - copy_w

    def kernel(x_ref, o_ref):
        o_ref[:, dst_h0:dst_h0 + copy_h, dst_w0:dst_w0 + copy_w] = (
            x_ref[:, src_h0:src_h0 + copy_h, src_w0:src_w0 + copy_w])
        if dst_h0 > 0:
            o_ref[:, :dst_h0, :] = jnp.zeros((cb, dst_h0, W_out), dtype)
        if bot_h > 0:
            o_ref[:, dst_h0 + copy_h:, :] = jnp.zeros((cb, bot_h, W_out), dtype)
        if dst_w0 > 0:
            o_ref[:, dst_h0:dst_h0 + copy_h, :dst_w0] = jnp.zeros((cb, copy_h, dst_w0), dtype)
        if right_w > 0:
            o_ref[:, dst_h0:dst_h0 + copy_h, dst_w0 + copy_w:] = (
                jnp.zeros((cb, copy_h, right_w), dtype))

    return kernel


def conv2d_same_pad(x, kernel_size, stride):
    """Pallas implementation of Conv2dSamePad.forward (TF 'SAME' zero padding)."""
    N, C, H, W = x.shape
    pad_top, pad_bottom, pad_left, pad_right = _same_pad_amounts(H, W, kernel_size, stride)

    # ---- Early return #1: nothing to do.
    if pad_top == 0 and pad_bottom == 0 and pad_left == 0 and pad_right == 0:
        return x

    H_out = H + pad_top + pad_bottom
    W_out = W + pad_left + pad_right

    # Static source/destination copy windows (negative pads crop, like F.pad).
    src_h0 = max(-pad_top, 0)
    src_w0 = max(-pad_left, 0)
    dst_h0 = max(pad_top, 0)
    dst_w0 = max(pad_left, 0)
    copy_h = H - max(-pad_top, 0) - max(-pad_bottom, 0)
    copy_w = W - max(-pad_left, 0) - max(-pad_right, 0)
    if copy_h <= 0 or copy_w <= 0 or H_out <= 0 or W_out <= 0:
        raise ValueError(
            "Conv2dSamePad: crop exceeds input extent "
            f"(pads={(pad_top, pad_bottom, pad_left, pad_right)}, H={H}, W={W})")

    # ---- Early return #2: pure crop (all pads <= 0) -> slice, no kernel.
    if pad_top <= 0 and pad_bottom <= 0 and pad_left <= 0 and pad_right <= 0:
        return x[:, :, src_h0:src_h0 + copy_h, src_w0:src_w0 + copy_w]

    dtype = x.dtype
    itemsize = jnp.dtype(dtype).itemsize
    pack = _sublane_pack(itemsize)
    budget, vmem_limit = _vmem_policy()
    hard_cap = max(budget, (vmem_limit - 2 * _MIB) // 2)   # per-step in+out ceiling

    NC = N * C
    HW_in = H * W
    HW_out = H_out * W_out
    bot_h = H_out - dst_h0 - copy_h
    right_w = W_out - dst_w0 - copy_w
    bytes_per_row = (HW_in + HW_out) * itemsize
    w_contig = (dst_w0 == 0 and right_w == 0 and copy_w == W)

    compiler_params = pltpu.CompilerParams(
        dimension_semantics=("parallel",),
        vmem_limit_bytes=vmem_limit,
    )

    # ---- Main path: lane-dense (NC, H*W) -> (NC, H_out*W_out) blocks.
    min_rows = NC if NC <= pack else pack
    flat_ok = (min_rows * bytes_per_row <= hard_cap) and (
        w_contig or copy_h <= _MAX_ASSEMBLED_ROWS)
    if flat_ok:
        cb = _pick_flat_rows(NC, bytes_per_row, budget, pack)
        grid = (pl.cdiv(NC, cb),)
        kernel = _build_flat_kernel(cb, dtype, W, W_out, HW_out, src_h0, src_w0,
                                    copy_h, copy_w, dst_h0, dst_w0, w_contig)
        out_flat = pl.pallas_call(
            kernel,
            out_shape=jax.ShapeDtypeStruct((NC, HW_out), dtype),
            grid_spec=pltpu.PrefetchScalarGridSpec(
                num_scalar_prefetch=0,
                grid=grid,
                in_specs=[pl.BlockSpec((cb, HW_in), lambda i: (i, 0))],
                out_specs=pl.BlockSpec((cb, HW_out), lambda i: (i, 0)),
            ),
            compiler_params=compiler_params,
        )(x.reshape(NC, HW_in))
        return out_flat.reshape(N, C, H_out, W_out)

    # ---- Fallback path: non-flattened blocks (tall interiors with W padding).
    if bytes_per_row <= hard_cap:
        cb = max(1, min(NC, budget // bytes_per_row, -(-NC // 8)))
        grid = (pl.cdiv(NC, cb),)
        kernel = _build_nchw_kernel(cb, dtype, H, W, H_out, W_out, src_h0, src_w0,
                                    copy_h, copy_w, dst_h0, dst_w0)
        out = pl.pallas_call(
            kernel,
            out_shape=jax.ShapeDtypeStruct((NC, H_out, W_out), dtype),
            grid_spec=pltpu.PrefetchScalarGridSpec(
                num_scalar_prefetch=0,
                grid=grid,
                in_specs=[pl.BlockSpec((cb, H, W), lambda i: (i, 0, 0))],
                out_specs=pl.BlockSpec((cb, H_out, W_out), lambda i: (i, 0, 0)),
            ),
            compiler_params=compiler_params,
        )(x.reshape(NC, H, W))
        return out.reshape(N, C, H_out, W_out)

    # TODO(synk): single channels larger than the per-step VMEM envelope need an
    # H-row-band grid (or HBM->HBM interior DMA); fall back to XLA pad for that rare case.
    xc = x[:, :, src_h0:src_h0 + copy_h, src_w0:src_w0 + copy_w]
    return jnp.pad(xc, ((0, 0), (0, 0), (dst_h0, bot_h), (dst_w0, right_w)))


if __name__ == "__main__":
    key = jax.random.PRNGKey(0)
    x = jax.random.normal(key, (2, 4, 16, 16), dtype=jnp.float32)

    def ref_same_pad(a, kernel_size, stride):
        H, W = a.shape[2], a.shape[3]
        pt, pb, pleft, pr = _same_pad_amounts(H, W, kernel_size, stride)
        # F.pad semantics: negative pads crop, positive pads zero-fill.
        a = a[:, :, max(-pt, 0):H - max(-pb, 0), max(-pleft, 0):W - max(-pr, 0)]
        return jnp.pad(a, ((0, 0), (0, 0),
                           (max(pt, 0), max(pb, 0)), (max(pleft, 0), max(pr, 0))))

    configs = [
        (3, 2),            # pads (0,1,0,1): lane-dense row-assembly path
        ((3, 1), (2, 1)),  # H-only pad: contiguous lane-dense path
        (5, 2),            # pads (1,2,1,2): zeros on all four sides
        (1, 2),            # pads (-1,0,-1,0): pure crop, no kernel
        ((1, 3), (2, 1)),  # mixed: crop in H, pad in W
    ]
    for ks, st in configs:
        out = jax.jit(lambda a, ks=ks, st=st: conv2d_same_pad(a, ks, st))(x)
        out = jax.block_until_ready(out)
        ref = ref_same_pad(x, ks, st)
        assert out.shape == ref.shape, (ks, st, out.shape, ref.shape)
        assert jnp.array_equal(out, ref), (ks, st, "mismatch vs reference")

    print("KERNEL_OK")
</pallas_src>

<mosaic_0001>
module attributes {stable_mosaic.version = 11 : i64} {
  func.func @kernel(%arg0: i32, %arg1: memref<8x256xf32, #tpu.memory_space<vmem>>, %arg2: memref<8x289xf32, #tpu.memory_space<vmem>>) attributes {dimension_semantics = [#tpu.dimension_semantics<parallel>], iteration_bounds = array<i64: 1>, scalar_prefetch = 0 : i64, scratch_operands = 0 : i64, tpu.core_type = #tpu.core_type<tc>, window_params = [{transform_indices = @transform_0, window_bounds = array<i64: 8, 256>}, {transform_indices = @transform_1, window_bounds = array<i64: 8, 289>}]} {
    %cst = arith.constant 0.000000e+00 : f32
    %0 = vector.broadcast %cst : f32 to vector<8x1xf32>
    %c0 = arith.constant 0 : index
    %c0_0 = arith.constant 0 : index
    %1 = vector.load %arg1[%c0, %c0_0] : memref<8x256xf32, #tpu.memory_space<vmem>>, vector<8x16xf32>
    %c0_1 = arith.constant 0 : index
    %c16 = arith.constant 16 : index
    %2 = vector.load %arg1[%c0_1, %c16] : memref<8x256xf32, #tpu.memory_space<vmem>>, vector<8x16xf32>
    %c0_2 = arith.constant 0 : index
    %c32 = arith.constant 32 : index
    %3 = vector.load %arg1[%c0_2, %c32] : memref<8x256xf32, #tpu.memory_space<vmem>>, vector<8x16xf32>
    %c0_3 = arith.constant 0 : index
    %c48 = arith.constant 48 : index
    %4 = vector.load %arg1[%c0_3, %c48] : memref<8x256xf32, #tpu.memory_space<vmem>>, vector<8x16xf32>
    %c0_4 = arith.constant 0 : index
    %c64 = arith.constant 64 : index
    %5 = vector.load %arg1[%c0_4, %c64] : memref<8x256xf32, #tpu.memory_space<vmem>>, vector<8x16xf32>
    %c0_5 = arith.constant 0 : index
    %c80 = arith.constant 80 : index
    %6 = vector.load %arg1[%c0_5, %c80] : memref<8x256xf32, #tpu.memory_space<vmem>>, vector<8x16xf32>
    %c0_6 = arith.constant 0 : index
    %c96 = arith.constant 96 : index
    %7 = vector.load %arg1[%c0_6, %c96] : memref<8x256xf32, #tpu.memory_space<vmem>>, vector<8x16xf32>
    %c0_7 = arith.constant 0 : index
    %c112 = arith.constant 112 : index
    %8 = vector.load %arg1[%c0_7, %c112] : memref<8x256xf32, #tpu.memory_space<vmem>>, vector<8x16xf32>
    %c0_8 = arith.constant 0 : index
    %c128 = arith.constant 128 : index
    %9 = vector.load %arg1[%c0_8, %c128] : memref<8x256xf32, #tpu.memory_space<vmem>>, vector<8x16xf32>
    %c0_9 = arith.constant 0 : index
    %c144 = arith.constant 144 : index
    %10 = vector.load %arg1[%c0_9, %c144] : memref<8x256xf32, #tpu.memory_space<vmem>>, vector<8x16xf32>
    %c0_10 = arith.constant 0 : index
    %c160 = arith.constant 160 : index
    %11 = vector.load %arg1[%c0_10, %c160] : memref<8x256xf32, #tpu.memory_space<vmem>>, vector<8x16xf32>
    %c0_11 = arith.constant 0 : index
    %c176 = arith.constant 176 : index
    %12 = vector.load %arg1[%c0_11, %c176] : memref<8x256xf32, #tpu.memory_space<vmem>>, vector<8x16xf32>
    %c0_12 = arith.constant 0 : index
    %c192 = arith.constant 192 : index
    %13 = vector.load %arg1[%c0_12, %c192] : memref<8x256xf32, #tpu.memory_space<vmem>>, vector<8x16xf32>
    %c0_13 = arith.constant 0 : index
    %c208 = arith.constant 208 : index
    %14 = vector.load %arg1[%c0_13, %c208] : memref<8x256xf32, #tpu.memory_space<vmem>>, vector<8x16xf32>
    %c0_14 = arith.constant 0 : index
    %c224 = arith.constant 224 : index
    %15 = vector.load %arg1[%c0_14, %c224] : memref<8x256xf32, #tpu.memory_space<vmem>>, vector<8x16xf32>
    %c0_15 = arith.constant 0 : index
    %c240 = arith.constant 240 : index
    %16 = vector.load %arg1[%c0_15, %c240] : memref<8x256xf32, #tpu.memory_space<vmem>>, vector<8x16xf32>
    %17 = tpu.concatenate %1, %0, %2, %0, %3, %0, %4, %0, %5, %0, %6, %0, %7, %0, %8, %0 in 1 : vector<8x16xf32>, vector<8x1xf32>, vector<8x16xf32>, vector<8x1xf32>, vector<8x16xf32>, vector<8x1xf32>, vector<8x16xf32>, vector<8x1xf32>, vector<8x16xf32>, vector<8x1xf32>, vector<8x16xf32>, vector<8x1xf32>, vector<8x16xf32>, vector<8x1xf32>, vector<8x16xf32>, vector<8x1xf32> -> vector<8x136xf32>
    %18 = tpu.concatenate %9, %0, %10, %0, %11, %0, %12, %0, %13, %0, %14, %0, %15, %0, %16, %0 in 1 : vector<8x16xf32>, vector<8x1xf32>, vector<8x16xf32>, vector<8x1xf32>, vector<8x16xf32>, vector<8x1xf32>, vector<8x16xf32>, vector<8x1xf32>, vector<8x16xf32>, vector<8x1xf32>, vector<8x16xf32>, vector<8x1xf32>, vector<8x16xf32>, vector<8x1xf32>, vector<8x16xf32>, vector<8x1xf32> -> vector<8x136xf32>
    %19 = tpu.concatenate %17, %18 in 1 : vector<8x136xf32>, vector<8x136xf32> -> vector<8x272xf32>
    %c0_16 = arith.constant 0 : index
    %c0_17 = arith.constant 0 : index
    %20 = vector.load %arg2[%c0_16, %c0_17] : memref<8x289xf32, #tpu.memory_space<vmem>>, vector<8x272xf32>
    tpu.vector_store %arg2[%c0_16, %c0_17], %19 {strides = array<i32>} : memref<8x289xf32, #tpu.memory_space<vmem>>, vector<8x272xf32>,
    %cst_18 = arith.constant 0.000000e+00 : f32
    %21 = vector.broadcast %cst_18 : f32 to vector<8x17xf32>
    %c0_19 = arith.constant 0 : index
    %c272 = arith.constant 272 : index
    %22 = vector.load %arg2[%c0_19, %c272] : memref<8x289xf32, #tpu.memory_space<vmem>>, vector<8x17xf32>
    tpu.vector_store %arg2[%c0_19, %c272], %21 {strides = array<i32>} : memref<8x289xf32, #tpu.memory_space<vmem>>, vector<8x17xf32>,
    return
  }
  func.func @transform_0(%arg0: i32) -> (i32, i32) {
    %c0_i32 = arith.constant 0 : i32
    %c0_i32_0 = arith.constant 0 : i32
    return %arg0, %c0_i32 : i32, i32
  }
  func.func @transform_1(%arg0: i32) -> (i32, i32) {
    %c0_i32 = arith.constant 0 : i32
    %c0_i32_0 = arith.constant 0 : i32
    return %arg0, %c0_i32 : i32, i32
  }
}

</mosaic_0001>

<llo_original>
// kernel: _lambda_.1
$region0: #{_lambda_.1}
  #allocation0 [shape = 'u32[]', space=smem, size = 0x4, offset = 0x4, fixed_abs, tag = 'smem constant byte address 0x4 - core index']
  #allocation1 [shape = 'u32[144,128]{1,0:T(1,128)}', space=vmem, size = 0x12000, scoped, tag = 'internal scratch']
  %s0 = inlined_call_operand.vmem [shape: f32[8,256], index: 0, kind: input, shape index: {}]
  %s1 = inlined_call_operand.vmem [shape: f32[8,289], index: 1, kind: output, shape index: {}]
  %s2 = sld [smem:[#allocation0]]
  $region14: #{_lambda_.1} parent=0
    _
  %s4 = ssub.s32 1, %s2
  %s5 = scalar_select 0, %s4, %s2
  // Predicated region
  $region2: #{_lambda_.1} parent=0 // pred_check
    _
  $region3: #{_lambda_.1} parent=0 // pred_check_branch
    %7 = sbr.rel (0) target = $region5
  $region4: #{_lambda_.1} parent=0 // pred_region
    _
  $region5: #{_lambda_.1} parent=0 // pred_fallthru
    _
  %v8 = vld [vmem:[%s0] sm:$0xff]
  %v9 = vld [vmem:[%s0 + $0x8] sm:$0xff]
  %11 = vrot.lane.b32.xlu0 %v8, 1
  %v12 = vpop.permute.xlu0 %11
  %14 = vrot.lane.b32.xlu0 %v8, 2
  %v15 = vpop.permute.xlu0 %14
  %17 = vrot.lane.b32.xlu0 %v8, 3
  %v18 = vpop.permute.xlu0 %17
  %20 = vrot.lane.b32.xlu0 %v8, 4
  %v21 = vpop.permute.xlu0 %20
  %23 = vrot.lane.b32.xlu0 %v8, 5
  %v24 = vpop.permute.xlu0 %23
  %26 = vrot.lane.b32.xlu0 %v8, 6
  %v27 = vpop.permute.xlu0 %26
  %29 = vrot.lane.b32.xlu0 %v8, 7
  %v30 = vpop.permute.xlu0 %29
  %vm32 = vcmask 130048
  %v33 = vsel %vm32, %v8, 0.0
  %vm34 = vcmask 138240
  %v35 = vsel %vm34, %v33, %v12
  %vm36 = vcmask 269312
  %v37 = vsel %vm36, %v35, 0.0
  %vm38 = vcmask 277504
  %v39 = vsel %vm38, %v37, %v15
  %vm40 = vcmask 408576
  %v41 = vsel %vm40, %v39, 0.0
  %vm42 = vcmask 416768
  %v43 = vsel %vm42, %v41, %v18
  %vm44 = vcmask 547840
  %v45 = vsel %vm44, %v43, 0.0
  %vm46 = vcmask 556032
  %v47 = vsel %vm46, %v45, %v21
  %vm48 = vcmask 687104
  %v49 = vsel %vm48, %v47, 0.0
  %vm50 = vcmask 695296
  %v51 = vsel %vm50, %v49, %v24
  %vm52 = vcmask 826368
  %v53 = vsel %vm52, %v51, 0.0
  %vm54 = vcmask 834560
  %v55 = vsel %vm54, %v53, %v27
  %vm56 = vcmask 965632
  %v57 = vsel %vm56, %v55, 0.0
  %vm58 = vcmask 973824
  %v59 = vsel %vm58, %v57, %v30
  %vm60 = vcmask 56320
  %v61 = vsel %vm60, %v30, 0.0
  %63 = vrot.lane.b32.xlu0 %v9, 1
  %v64 = vpop.permute.xlu0 %63
  %66 = vrot.lane.b32.xlu0 %v9, 2
  %v67 = vpop.permute.xlu0 %66
  %69 = vrot.lane.b32.xlu0 %v9, 3
  %v70 = vpop.permute.xlu0 %69
  %72 = vrot.lane.b32.xlu0 %v9, 4
  %v73 = vpop.permute.xlu0 %72
  %75 = vrot.lane.b32.xlu0 %v9, 5
  %v76 = vpop.permute.xlu0 %75
  %78 = vrot.lane.b32.xlu0 %v9, 6
  %v79 = vpop.permute.xlu0 %78
  %81 = vrot.lane.b32.xlu0 %v9, 7
  %v82 = vpop.permute.xlu0 %81
  %v84 = vsel %vm32, %v9, 0.0
  %v85 = vsel %vm34, %v84, %v64
  %v86 = vsel %vm36, %v85, 0.0
  %v87 = vsel %vm38, %v86, %v67
  %v88 = vsel %vm40, %v87, 0.0
  %v89 = vsel %vm42, %v88, %v70
  %v90 = vsel %vm44, %v89, 0.0
  %v91 = vsel %vm46, %v90, %v73
  %v92 = vsel %vm48, %v91, 0.0
  %v93 = vsel %vm50, %v92, %v76
  %v94 = vsel %vm52, %v93, 0.0
  %v95 = vsel %vm54, %v94, %v79
  %v96 = vsel %vm56, %v95, 0.0
  %v97 = vsel %vm58, %v96, %v82
  %v98 = vsel %vm60, %v82, 0.0
  %101 = vrot.lane.b32.xlu0 %v97, 8
  %v102 = vpop.permute.xlu0 %101
  %103 = vrot.lane.b32.xlu0 %v98, 8
  %v104 = vpop.permute.xlu0 %103
  %vm105 = vcmask 64512
  %v106 = vsel %vm105, %v102, %v104
  %v109 = vsel %vm105, %v61, %v102
  %110 = vst [vmem:[%s1] sm:$0xff] %v59
  %111 = vst [vmem:[%s1 + $0x8] sm:$0xff] %v109
  %112 = vst.msk [vmem:[%s1 + $0x10] sm:$0xff] %vm32, %v106
  %vm113 = vcmask 269440
  %114 = vst.msk [vmem:[%s1 + $0x10] sm:$0xff] %vm113, 0.0
  // Predicated region
  $region6: #{_lambda_.1} parent=0 // pred_check
    _
  $region7: #{_lambda_.1} parent=0 // pred_check_branch
    %116 = sbr.rel (0) target = $region9
  $region8: #{_lambda_.1} parent=0 // pred_region
    _
  $region9: #{_lambda_.1} parent=0 // pred_fallthru
    _
  // Predicated region
  $region10: #{_lambda_.1} parent=0 // pred_check
    _
  $region11: #{_lambda_.1} parent=0 // pred_check_branch
    %118 = sbr.rel (0) target = $region13
  $region12: #{_lambda_.1} parent=0 // pred_region
    _
  $region13: #{_lambda_.1} parent=0 // pred_fallthru
    _

</llo_original>
